<compile_context>
chip_gen: v6e
topology: v6e:2x2x1
jax: 0.10.0
libtpu: 0.0.40
codegen_flags: <defaults>
</compile_context>

<pallas_src>
import functools

import jax
import jax.numpy as jnp
from jax.experimental import pallas as pl
from jax.experimental.pallas import tpu as pltpu


def _round_up(n, m):
    return (n + m - 1) // m * m


# ---------- Pass 1: dilated conv + bias + ReLU + BN partial statistics ------

def _conv_relu_stats_kernel(x_ref, w_ref, bias_ref,
                            act_ref, sum_ref, sumsq_ref,
                            *, kernel_size, dilation, t_valid):
    # x_ref     : [C_in_p, T_TILE + dilation*(K-1)]   haloed input window
    # w_ref     : [K, C_out_p, C_in_p]
    # bias_ref  : [C_out_p, 1]
    # act_ref   : [C_out_p, T_TILE]   pre-norm activation (f32)
    # sum_ref   : [C_out_p, 1]        per-tile sum of act over valid T
    # sumsq_ref : [C_out_p, 1]        per-tile sum of act^2 over valid T
    t = pl.program_id(1)
    c_out_p, t_tile = act_ref.shape

    x_win = x_ref[...]                                       # single VMEM load

    # Dilated Conv1d as K tap matmuls on the MXU, f32 accumulation.
    acc = jnp.zeros((c_out_p, t_tile), dtype=jnp.float32)
    for k in range(kernel_size):                             # static, small K
        w_k = w_ref[k]                                       # [C_out_p, C_in_p]
        x_k = x_win[:, k * dilation:k * dilation + t_tile]   # [C_in_p, T_TILE]
        acc = acc + jax.lax.dot_general(
            w_k, x_k,
            dimension_numbers=(((1,), (0,)), ((), ())),
            preferred_element_type=jnp.float32)

    act = jnp.maximum(acc + bias_ref[...], 0.0)              # bias + ReLU (f32)
    act_ref[...] = act

    # One-pass BN partial statistics; mask T-padding in the last tile.
    valid = jnp.minimum(t_valid - t * t_tile, t_tile)
    lane = jax.lax.broadcasted_iota(jnp.int32, (c_out_p, t_tile), 1)
    act_m = jnp.where(lane < valid, act, 0.0)
    sum_ref[...] = jnp.sum(act_m, axis=1, keepdims=True)
    sumsq_ref[...] = jnp.sum(act_m * act_m, axis=1, keepdims=True)


# ---------- Pass 2: fused BatchNorm scale/shift epilogue --------------------

def _bn_affine_kernel(act_ref, scale_ref, shift_ref, o_ref):
    # [C_out_p, T_TILE] * [C_out_p, 1] + [C_out_p, 1]  (2 VPU ops / element)
    o_ref[...] = act_ref[...] * scale_ref[...] + shift_ref[...]


def tdnn_block(x, w, b, gamma, beta, *, kernel_size, dilation, eps=1e-5,
               compute_dtype=jnp.bfloat16, t_tile=None, vmem_limit_bytes=None):
    """TDNNBlock forward. x: [B, C_in, T] -> [B, C_out, T] in x.dtype."""
    B, C_in, T = x.shape
    C_out = w.shape[0]
    assert w.shape == (C_out, C_in, kernel_size)
    if kernel_size % 2 != 1:
        # TODO(synk): even kernel_size needs SpeechBrain's asymmetric padding.
        raise NotImplementedError("only odd kernel_size is supported")

    halo = dilation * (kernel_size - 1)
    pad = halo // 2

    # Channel padding to sublane multiples; lane-dense T tiles (mult. of 128).
    c_in_p = _round_up(C_in, 8)
    c_out_p = _round_up(C_out, 8)
    if t_tile is None:
        t_tile = min(512, _round_up(T, 128))   # tile sized for v7x 64MiB VMEM
    t_tile = _round_up(t_tile, 128)
    n_t = -(-T // t_tile)
    t_proc = n_t * t_tile

    # Reflect "same" padding + zero padding (time -> t_proc, channels -> 8x).
    x_p = jnp.pad(x, ((0, 0), (0, 0), (pad, pad)), mode="reflect")
    x_p = jnp.pad(x_p, ((0, 0), (0, c_in_p - C_in), (0, t_proc - T)))
    x_p = x_p.astype(compute_dtype)            # bf16 operands for the MXU

    # Pre-window haloed tiles so plain Blocked BlockSpecs pipeline them
    # (overlap is only halo/t_tile extra HBM traffic).
    win = t_tile + halo
    x_tiles = jnp.stack(
        [x_p[:, :, i * t_tile:i * t_tile + win] for i in range(n_t)], axis=1)
    # x_tiles: [B, n_t, c_in_p, win]

    w_p = jnp.pad(w, ((0, c_out_p - C_out), (0, c_in_p - C_in), (0, 0)))
    w_p = jnp.transpose(w_p, (2, 0, 1)).astype(compute_dtype)  # [K, Co_p, Ci_p]
    bias_col = jnp.pad(b.astype(jnp.float32),
                       (0, c_out_p - C_out)).reshape(c_out_p, 1)

    grid = (B, n_t)
    par = ("parallel", "parallel")   # lets v7x shard both axes across its 2 TCs

    kernel1 = functools.partial(
        _conv_relu_stats_kernel,
        kernel_size=kernel_size, dilation=dilation, t_valid=T)

    act, sums, sumsqs = pl.pallas_call(
        kernel1,
        out_shape=(
            jax.ShapeDtypeStruct((B, c_out_p, t_proc), jnp.float32),
            jax.ShapeDtypeStruct((B, n_t, c_out_p, 1), jnp.float32),
            jax.ShapeDtypeStruct((B, n_t, c_out_p, 1), jnp.float32),
        ),
        grid_spec=pltpu.PrefetchScalarGridSpec(
            num_scalar_prefetch=0,
            grid=grid,
            in_specs=[
                pl.BlockSpec((None, None, c_in_p, win),
                             lambda bi, ti: (bi, ti, 0, 0)),
                pl.BlockSpec((kernel_size, c_out_p, c_in_p),
                             lambda bi, ti: (0, 0, 0)),      # resident weights
                pl.BlockSpec((c_out_p, 1), lambda bi, ti: (0, 0)),
            ],
            out_specs=(
                pl.BlockSpec((None, c_out_p, t_tile),
                             lambda bi, ti: (bi, 0, ti)),    # lane-dense tiles
                pl.BlockSpec((None, None, c_out_p, 1),
                             lambda bi, ti: (bi, ti, 0, 0)),
                pl.BlockSpec((None, None, c_out_p, 1),
                             lambda bi, ti: (bi, ti, 0, 0)),
            ),
        ),
        compiler_params=pltpu.CompilerParams(
            dimension_semantics=par, vmem_limit_bytes=vmem_limit_bytes),
    )(x_tiles, w_p, bias_col)

    # Tiny glue: global batch statistics -> fused per-channel scale / shift.
    count = float(B * T)
    total = jnp.sum(sums, axis=(0, 1))                  # [c_out_p, 1]
    total_sq = jnp.sum(sumsqs, axis=(0, 1))             # [c_out_p, 1]
    mean = total / count
    var = jnp.maximum(total_sq / count - mean * mean, 0.0)   # biased variance
    inv_std = jax.lax.rsqrt(var + eps)
    gamma_col = jnp.pad(gamma.astype(jnp.float32),
                        (0, c_out_p - C_out)).reshape(c_out_p, 1)
    beta_col = jnp.pad(beta.astype(jnp.float32),
                       (0, c_out_p - C_out)).reshape(c_out_p, 1)
    scale = gamma_col * inv_std
    shift = beta_col - mean * scale

    y = pl.pallas_call(
        _bn_affine_kernel,
        out_shape=jax.ShapeDtypeStruct((B, c_out_p, t_proc), jnp.float32),
        grid_spec=pltpu.PrefetchScalarGridSpec(
            num_scalar_prefetch=0,
            grid=grid,
            in_specs=[
                pl.BlockSpec((None, c_out_p, t_tile),
                             lambda bi, ti: (bi, 0, ti)),
                pl.BlockSpec((c_out_p, 1), lambda bi, ti: (0, 0)),
                pl.BlockSpec((c_out_p, 1), lambda bi, ti: (0, 0)),
            ],
            out_specs=pl.BlockSpec((None, c_out_p, t_tile),
                                   lambda bi, ti: (bi, 0, ti)),
        ),
        input_output_aliases={0: 0},        # normalize in place into `act`
        compiler_params=pltpu.CompilerParams(
            dimension_semantics=par, vmem_limit_bytes=vmem_limit_bytes),
    )(act, scale, shift)

    return y[:, :C_out, :T].astype(x.dtype)


# ---------- Pure-JAX reference (same semantics as the PyTorch module) -------

def tdnn_block_ref(x, w, b, gamma, beta, *, kernel_size, dilation, eps=1e-5):
    pad = (dilation * (kernel_size - 1)) // 2
    x_pad = jnp.pad(x, ((0, 0), (0, 0), (pad, pad)), mode="reflect")
    T = x.shape[-1]
    C_out = w.shape[0]
    acc = jnp.zeros((x.shape[0], C_out, T), dtype=jnp.float32)
    for k in range(kernel_size):
        acc = acc + jnp.einsum(
            "oc,bct->bot", w[:, :, k],
            x_pad[:, :, k * dilation:k * dilation + T],
            precision=jax.lax.Precision.HIGHEST)
    acc = acc + b[None, :, None]
    act = jnp.maximum(acc, 0.0)
    mean = jnp.mean(act, axis=(0, 2), keepdims=True)
    var = jnp.mean((act - mean) ** 2, axis=(0, 2), keepdims=True)
    y = (act - mean) * jax.lax.rsqrt(var + eps)
    return y * gamma[None, :, None] + beta[None, :, None]


if __name__ == "__main__":
    key = jax.random.PRNGKey(0)

    configs = [
        # (B, C_in, C_out, T, K, dilation, t_tile)
        (2, 4, 6, 16, 3, 1, None),     # small shapes implied by the module
        (3, 16, 12, 200, 3, 2, 128),   # dilation>1, multi T-tile, masked tail
    ]

    for (B, C_in, C_out, T, K, dil, tt) in configs:
        key, kx, kw, kb, kg, kbe = jax.random.split(key, 6)
        x = jax.random.normal(kx, (B, C_in, T), dtype=jnp.float32)
        w = jax.random.normal(kw, (C_out, C_in, K), dtype=jnp.float32) * 0.3
        b = jax.random.normal(kb, (C_out,), dtype=jnp.float32) * 0.1
        gamma = 1.0 + 0.1 * jax.random.normal(kg, (C_out,), dtype=jnp.float32)
        beta = 0.1 * jax.random.normal(kbe, (C_out,), dtype=jnp.float32)

        ref = tdnn_block_ref(x, w, b, gamma, beta, kernel_size=K, dilation=dil)

        # f32 operands: tight structural check of the tiled two-pass kernel.
        f32_fn = jax.jit(functools.partial(
            tdnn_block, kernel_size=K, dilation=dil,
            compute_dtype=jnp.float32, t_tile=tt))
        out_f32 = jax.block_until_ready(f32_fn(x, w, b, gamma, beta))
        assert out_f32.shape == (B, C_out, T)
        assert jnp.allclose(out_f32, ref, atol=1e-2, rtol=1e-2), \
            f"f32 mismatch: {jnp.max(jnp.abs(out_f32 - ref))}"

        # bf16 MXU operands (default fast path): looser numerical check.
        bf16_fn = jax.jit(functools.partial(
            tdnn_block, kernel_size=K, dilation=dil,
            compute_dtype=jnp.bfloat16, t_tile=tt))
        out_bf16 = jax.block_until_ready(bf16_fn(x, w, b, gamma, beta))
        assert out_bf16.shape == (B, C_out, T)
        assert jnp.allclose(out_bf16, ref, atol=0.15, rtol=0.1), \
            f"bf16 mismatch: {jnp.max(jnp.abs(out_bf16 - ref))}"

    print("KERNEL_OK")
</pallas_src>

<mosaic_0001>
module attributes {stable_mosaic.version = 11 : i64} {
  func.func @_conv_relu_stats_kernel(%arg0: i32, %arg1: i32, %arg2: memref<1x1x8x130xf32, #tpu.memory_space<vmem>>, %arg3: memref<3x8x8xf32, #tpu.memory_space<vmem>>, %arg4: memref<8x1xf32, #tpu.memory_space<vmem>>, %arg5: memref<1x8x128xf32, #tpu.memory_space<vmem>>, %arg6: memref<1x1x8x1xf32, #tpu.memory_space<vmem>>, %arg7: memref<1x1x8x1xf32, #tpu.memory_space<vmem>>) attributes {dimension_semantics = [#tpu.dimension_semantics<parallel>, #tpu.dimension_semantics<parallel>], iteration_bounds = array<i64: 2, 1>, scalar_prefetch = 0 : i64, scratch_operands = 0 : i64, tpu.core_type = #tpu.core_type<tc>, window_params = [{transform_indices = @transform_0, window_bounds = array<i64: 1, 1, 8, 130>}, {pipeline_mode = #tpu.pipeline_mode<synchronous>, transform_indices = @transform_1, window_bounds = array<i64: 3, 8, 8>}, {pipeline_mode = #tpu.pipeline_mode<synchronous>, transform_indices = @transform_2, window_bounds = array<i64: 8, 1>}, {transform_indices = @transform_3, window_bounds = array<i64: 1, 8, 128>}, {transform_indices = @transform_4, window_bounds = array<i64: 1, 1, 8, 1>}, {transform_indices = @transform_5, window_bounds = array<i64: 1, 1, 8, 1>}]} {
    %c0 = arith.constant 0 : index
    %c0_0 = arith.constant 0 : index
    %c0_1 = arith.constant 0 : index
    %c0_2 = arith.constant 0 : index
    %0 = vector.load %arg2[%c0, %c0_0, %c0_1, %c0_2] : memref<1x1x8x130xf32, #tpu.memory_space<vmem>>, vector<1x1x8x130xf32>
    %1 = vector.shape_cast %0 : vector<1x1x8x130xf32> to vector<8x130xf32>
    %cst = arith.constant 0.000000e+00 : f32
    %2 = vector.broadcast %cst : f32 to vector<8x128xf32>
    %c0_3 = arith.constant 0 : index
    %c0_4 = arith.constant 0 : index
    %c0_5 = arith.constant 0 : index
    %3 = vector.load %arg3[%c0_3, %c0_4, %c0_5] : memref<3x8x8xf32, #tpu.memory_space<vmem>>, vector<1x8x8xf32>
    %4 = vector.shape_cast %3 : vector<1x8x8xf32> to vector<8x8xf32>
    %5 = vector.extract_strided_slice %1 {offsets = [0, 0], sizes = [8, 128], strides = [1, 1]} : vector<8x130xf32> to vector<8x128xf32>
    %cst_6 = arith.constant dense<0.000000e+00> : vector<8x128xf32>
    %6 = tpu.matmul %4, %5, %cst_6 {dimension_numbers = #tpu.dot_dimension_numbers<[1], [0], [0], [1], [0, 0, 1, 1], [], []>} : vector<8x8xf32>, vector<8x128xf32>, vector<8x128xf32> -> vector<8x128xf32>
    %7 = arith.addf %2, %6 : vector<8x128xf32>
    %c1 = arith.constant 1 : index
    %c0_7 = arith.constant 0 : index
    %c0_8 = arith.constant 0 : index
    %8 = vector.load %arg3[%c1, %c0_7, %c0_8] : memref<3x8x8xf32, #tpu.memory_space<vmem>>, vector<1x8x8xf32>
    %9 = vector.shape_cast %8 : vector<1x8x8xf32> to vector<8x8xf32>
    %10 = vector.extract_strided_slice %1 {offsets = [0, 1], sizes = [8, 128], strides = [1, 1]} : vector<8x130xf32> to vector<8x128xf32>
    %cst_9 = arith.constant dense<0.000000e+00> : vector<8x128xf32>
    %11 = tpu.matmul %9, %10, %cst_9 {dimension_numbers = #tpu.dot_dimension_numbers<[1], [0], [0], [1], [0, 0, 1, 1], [], []>} : vector<8x8xf32>, vector<8x128xf32>, vector<8x128xf32> -> vector<8x128xf32>
    %12 = arith.addf %7, %11 : vector<8x128xf32>
    %c2 = arith.constant 2 : index
    %c0_10 = arith.constant 0 : index
    %c0_11 = arith.constant 0 : index
    %13 = vector.load %arg3[%c2, %c0_10, %c0_11] : memref<3x8x8xf32, #tpu.memory_space<vmem>>, vector<1x8x8xf32>
    %14 = vector.shape_cast %13 : vector<1x8x8xf32> to vector<8x8xf32>
    %15 = vector.extract_strided_slice %1 {offsets = [0, 2], sizes = [8, 128], strides = [1, 1]} : vector<8x130xf32> to vector<8x128xf32>
    %cst_12 = arith.constant dense<0.000000e+00> : vector<8x128xf32>
    %16 = tpu.matmul %14, %15, %cst_12 {dimension_numbers = #tpu.dot_dimension_numbers<[1], [0], [0], [1], [0, 0, 1, 1], [], []>} : vector<8x8xf32>, vector<8x128xf32>, vector<8x128xf32> -> vector<8x128xf32>
    %17 = arith.addf %12, %16 : vector<8x128xf32>
    %c0_13 = arith.constant 0 : index
    %c0_14 = arith.constant 0 : index
    %18 = vector.load %arg4[%c0_13, %c0_14] : memref<8x1xf32, #tpu.memory_space<vmem>>, vector<8x1xf32>
    %19 = vector.broadcast %18 : vector<8x1xf32> to vector<8x128xf32>
    %20 = arith.addf %17, %19 : vector<8x128xf32>
    %cst_15 = arith.constant 0.000000e+00 : f32
    %21 = vector.broadcast %cst_15 : f32 to vector<8x128xf32>
    %22 = arith.maximumf %20, %21 : vector<8x128xf32>
    %c0_16 = arith.constant 0 : index
    %c0_17 = arith.constant 0 : index
    %c0_18 = arith.constant 0 : index
    %23 = vector.load %arg5[%c0_16, %c0_17, %c0_18] : memref<1x8x128xf32, #tpu.memory_space<vmem>>, vector<1x8x128xf32>
    %24 = vector.shape_cast %23 : vector<1x8x128xf32> to vector<8x128xf32>
    %25 = vector.shape_cast %22 : vector<8x128xf32> to vector<1x8x128xf32>
    tpu.vector_store %arg5[%c0_16, %c0_17, %c0_18], %25 {strides = array<i32>} : memref<1x8x128xf32, #tpu.memory_space<vmem>>, vector<1x8x128xf32>,
    %c128_i32 = arith.constant 128 : i32
    %26 = arith.muli %arg1, %c128_i32 : i32
    %c16_i32 = arith.constant 16 : i32
    %27 = arith.subi %c16_i32, %26 : i32
    %c128_i32_19 = arith.constant 128 : i32
    %28 = arith.minsi %27, %c128_i32_19 : i32
    %29 = tpu.iota {dimensions = array<i32: 1>} : vector<8x128xi32>
    %30 = vector.broadcast %28 : i32 to vector<8x128xi32>
    %31 = arith.cmpi slt, %29, %30 : vector<8x128xi32>
    %cst_20 = arith.constant 0.000000e+00 : f32
    %32 = vector.broadcast %cst_20 : f32 to vector<8x128xf32>
    %33 = arith.select %31, %22, %32 : vector<8x128xi1>, vector<8x128xf32>
    %cst_21 = arith.constant dense<0.000000e+00> : vector<8xf32>
    %34 = vector.multi_reduction <add>, %33, %cst_21 [1] : vector<8x128xf32> to vector<8xf32>
    %35 = vector.shape_cast %34 : vector<8xf32> to vector<8x1xf32>
    %c0_22 = arith.constant 0 : index
    %c0_23 = arith.constant 0 : index
    %c0_24 = arith.constant 0 : index
    %c0_25 = arith.constant 0 : index
    %36 = vector.load %arg6[%c0_22, %c0_23, %c0_24, %c0_25] : memref<1x1x8x1xf32, #tpu.memory_space<vmem>>, vector<1x1x8x1xf32>
    %37 = vector.shape_cast %36 : vector<1x1x8x1xf32> to vector<8x1xf32>
    %38 = vector.shape_cast %35 : vector<8x1xf32> to vector<1x1x8x1xf32>
    tpu.vector_store %arg6[%c0_22, %c0_23, %c0_24, %c0_25], %38 {strides = array<i32>} : memref<1x1x8x1xf32, #tpu.memory_space<vmem>>, vector<1x1x8x1xf32>,
    %39 = arith.mulf %33, %33 : vector<8x128xf32>
    %cst_26 = arith.constant dense<0.000000e+00> : vector<8xf32>
    %40 = vector.multi_reduction <add>, %39, %cst_26 [1] : vector<8x128xf32> to vector<8xf32>
    %41 = vector.shape_cast %40 : vector<8xf32> to vector<8x1xf32>
    %c0_27 = arith.constant 0 : index
    %c0_28 = arith.constant 0 : index
    %c0_29 = arith.constant 0 : index
    %c0_30 = arith.constant 0 : index
    %42 = vector.load %arg7[%c0_27, %c0_28, %c0_29, %c0_30] : memref<1x1x8x1xf32, #tpu.memory_space<vmem>>, vector<1x1x8x1xf32>
    %43 = vector.shape_cast %42 : vector<1x1x8x1xf32> to vector<8x1xf32>
    %44 = vector.shape_cast %41 : vector<8x1xf32> to vector<1x1x8x1xf32>
    tpu.vector_store %arg7[%c0_27, %c0_28, %c0_29, %c0_30], %44 {strides = array<i32>} : memref<1x1x8x1xf32, #tpu.memory_space<vmem>>, vector<1x1x8x1xf32>,
    return
  }
  func.func @transform_0(%arg0: i32, %arg1: i32) -> (i32, i32, i32, i32) {
    %c0_i32 = arith.constant 0 : i32
    %c0_i32_0 = arith.constant 0 : i32
    %c0_i32_1 = arith.constant 0 : i32
    return %arg0, %arg1, %c0_i32, %c0_i32_0 : i32, i32, i32, i32
  }
  func.func @transform_1(%arg0: i32, %arg1: i32) -> (i32, i32, i32) {
    %c0_i32 = arith.constant 0 : i32
    %c0_i32_0 = arith.constant 0 : i32
    %c0_i32_1 = arith.constant 0 : i32
    %c0_i32_2 = arith.constant 0 : i32
    return %c0_i32, %c0_i32_0, %c0_i32_1 : i32, i32, i32
  }
  func.func @transform_2(%arg0: i32, %arg1: i32) -> (i32, i32) {
    %c0_i32 = arith.constant 0 : i32
    %c0_i32_0 = arith.constant 0 : i32
    %c0_i32_1 = arith.constant 0 : i32
    return %c0_i32, %c0_i32_0 : i32, i32
  }
  func.func @transform_3(%arg0: i32, %arg1: i32) -> (i32, i32, i32) {
    %c0_i32 = arith.constant 0 : i32
    %c0_i32_0 = arith.constant 0 : i32
    return %arg0, %c0_i32, %arg1 : i32, i32, i32
  }
  func.func @transform_4(%arg0: i32, %arg1: i32) -> (i32, i32, i32, i32) {
    %c0_i32 = arith.constant 0 : i32
    %c0_i32_0 = arith.constant 0 : i32
    %c0_i32_1 = arith.constant 0 : i32
    return %arg0, %arg1, %c0_i32, %c0_i32_0 : i32, i32, i32, i32
  }
  func.func @transform_5(%arg0: i32, %arg1: i32) -> (i32, i32, i32, i32) {
    %c0_i32 = arith.constant 0 : i32
    %c0_i32_0 = arith.constant 0 : i32
    %c0_i32_1 = arith.constant 0 : i32
    return %arg0, %arg1, %c0_i32, %c0_i32_0 : i32, i32, i32, i32
  }
}

module attributes {stable_mosaic.version = 11 : i64} {
  func.func @_bn_affine_kernel(%arg0: i32, %arg1: i32, %arg2: memref<1x8x128xf32, #tpu.memory_space<vmem>>, %arg3: memref<8x1xf32, #tpu.memory_space<vmem>>, %arg4: memref<8x1xf32, #tpu.memory_space<vmem>>, %arg5: memref<1x8x128xf32, #tpu.memory_space<vmem>>) attributes {dimension_semantics = [#tpu.dimension_semantics<parallel>, #tpu.dimension_semantics<parallel>], iteration_bounds = array<i64: 2, 1>, scalar_prefetch = 0 : i64, scratch_operands = 0 : i64, tpu.core_type = #tpu.core_type<tc>, window_params = [{transform_indices = @transform_0, window_bounds = array<i64: 1, 8, 128>}, {pipeline_mode = #tpu.pipeline_mode<synchronous>, transform_indices = @transform_1, window_bounds = array<i64: 8, 1>}, {pipeline_mode = #tpu.pipeline_mode<synchronous>, transform_indices = @transform_2, window_bounds = array<i64: 8, 1>}, {transform_indices = @transform_3, window_bounds = array<i64: 1, 8, 128>}]} {
    %c0 = arith.constant 0 : index
    %c0_0 = arith.constant 0 : index
    %c0_1 = arith.constant 0 : index
    %0 = vector.load %arg2[%c0, %c0_0, %c0_1] : memref<1x8x128xf32, #tpu.memory_space<vmem>>, vector<1x8x128xf32>
    %1 = vector.shape_cast %0 : vector<1x8x128xf32> to vector<8x128xf32>
    %c0_2 = arith.constant 0 : index
    %c0_3 = arith.constant 0 : index
    %2 = vector.load %arg3[%c0_2, %c0_3] : memref<8x1xf32, #tpu.memory_space<vmem>>, vector<8x1xf32>
    %3 = vector.broadcast %2 : vector<8x1xf32> to vector<8x128xf32>
    %4 = arith.mulf %1, %3 : vector<8x128xf32>
    %c0_4 = arith.constant 0 : index
    %c0_5 = arith.constant 0 : index
    %5 = vector.load %arg4[%c0_4, %c0_5] : memref<8x1xf32, #tpu.memory_space<vmem>>, vector<8x1xf32>
    %6 = vector.broadcast %5 : vector<8x1xf32> to vector<8x128xf32>
    %7 = arith.addf %4, %6 : vector<8x128xf32>
    %c0_6 = arith.constant 0 : index
    %c0_7 = arith.constant 0 : index
    %c0_8 = arith.constant 0 : index
    %8 = vector.load %arg5[%c0_6, %c0_7, %c0_8] : memref<1x8x128xf32, #tpu.memory_space<vmem>>, vector<1x8x128xf32>
    %9 = vector.shape_cast %8 : vector<1x8x128xf32> to vector<8x128xf32>
    %10 = vector.shape_cast %7 : vector<8x128xf32> to vector<1x8x128xf32>
    tpu.vector_store %arg5[%c0_6, %c0_7, %c0_8], %10 {strides = array<i32>} : memref<1x8x128xf32, #tpu.memory_space<vmem>>, vector<1x8x128xf32>,
    return
  }
  func.func @transform_0(%arg0: i32, %arg1: i32) -> (i32, i32, i32) {
    %c0_i32 = arith.constant 0 : i32
    %c0_i32_0 = arith.constant 0 : i32
    return %arg0, %c0_i32, %arg1 : i32, i32, i32
  }
  func.func @transform_1(%arg0: i32, %arg1: i32) -> (i32, i32) {
    %c0_i32 = arith.constant 0 : i32
    %c0_i32_0 = arith.constant 0 : i32
    %c0_i32_1 = arith.constant 0 : i32
    return %c0_i32, %c0_i32_0 : i32, i32
  }
  func.func @transform_2(%arg0: i32, %arg1: i32) -> (i32, i32) {
    %c0_i32 = arith.constant 0 : i32
    %c0_i32_0 = arith.constant 0 : i32
    %c0_i32_1 = arith.constant 0 : i32
    return %c0_i32, %c0_i32_0 : i32, i32
  }
  func.func @transform_3(%arg0: i32, %arg1: i32) -> (i32, i32, i32) {
    %c0_i32 = arith.constant 0 : i32
    %c0_i32_0 = arith.constant 0 : i32
    return %arg0, %c0_i32, %arg1 : i32, i32, i32
  }
}

</mosaic_0001>

<llo_original>
// kernel: tdnn_block.2
$region0: #{tdnn_block.2}
  #allocation0 [shape = 'u32[]', space=smem, size = 0x4, offset = 0x4, fixed_abs, tag = 'smem constant byte address 0x4 - core index']
  #allocation1 [shape = 'u32[144,128]{1,0:T(1,128)}', space=vmem, size = 0x12000, scoped, tag = 'internal scratch']
  %s0 = inlined_call_operand.vmem [shape: f32[2,1,8,130], index: 0, kind: input, shape index: {}]
  %s1 = inlined_call_operand.vmem [shape: f32[3,8,8], index: 1, kind: input, shape index: {}]
  %s2 = inlined_call_operand.vmem [shape: f32[8,1], index: 2, kind: input, shape index: {}]
  %s3 = inlined_call_operand.vmem [shape: f32[2,8,128], index: 3, kind: output, shape index: {0}]
  %s4 = inlined_call_operand.vmem [shape: f32[2,1,8,1], index: 4, kind: output, shape index: {1}]
  %s5 = inlined_call_operand.vmem [shape: f32[2,1,8,1], index: 5, kind: output, shape index: {2}]
  %6 = xla_tuple %s3, %s4, %s5
  %s7 = sld [smem:[#allocation0]]
  $region61: #{tdnn_block.2} parent=0
    _
  %s9 = ssub.s32 1, %s7
  %s10 = scalar_select 0, %s9, %s7
  loop: start=0, step=1, limit=4
  $region2: #{tdnn_block.2} parent=0 // loop_pre_header
    _
  $region3: #{tdnn_block.2} parent=0 // loop_header
    %s12 = sphi 0, %s16
    %p13 = scmp.ge.s32.totalorder %s12, 4
    %s19 = sphi 0, %s31
    %s20 = sphi 0, %s27
    %s21 = sphi 0, %s19
    %s22 = sphi 0, %s20
    %s23 = sphi 0, %s21
    %s24 = sphi 0, %s22
    %s36 = sphi 0, %s38
    %s39 = sphi 0, %s36
    %s40 = sphi 0, %s39
    %s56 = sphi 0, %s40
    %s60 = sphi 0, %s60
    %s62 = sphi 0, %s60
    %s63 = sphi 0, %s62
    %s77 = sphi 0, %s63
    %s81 = sphi 0, %s81
    %s83 = sphi 0, %s81
    %s84 = sphi 0, %s83
    %s98 = sphi 0, %s84
    %s106 = sphi 0, %s108
    %s109 = sphi 0, %s106
    %s110 = sphi 0, %s109
    %s126 = sphi 0, %s110
    %s134 = sphi 0, %s136
    %s137 = sphi 0, %s134
    %s138 = sphi 0, %s137
    %s154 = sphi 0, %s138
    %s162 = sphi 0, %s164
    %s165 = sphi 0, %s162
    %s166 = sphi 0, %s165
    %s182 = sphi 0, %s166
  $region4: #{tdnn_block.2} parent=0 // loop_header_branch
    %15 = sbr.rel (%p13) target = $region8
  $region5: #{tdnn_block.2} parent=0 // loop_body
    %s17 = ssub.s32 %s12, 1
    %s18 = ssub.s32 %s12, 2
    %s25 = sadd.s32 1, %s20
    %p26 = scmp.ge.s32.totalorder %s25, 1
    %s27 = scalar_select %p26, 0, %s25
    %s28 = sadd.s32 1, %s19
    %s29 = scalar_select %p26, %s28, %s19
    %p30 = scmp.ge.s32.totalorder %s29, 2
    %s31 = scalar_select %p30, 0, %s29
    %s32 = ssub.s32 %s19, %s31
    %s33 = ssub.s32 %s20, %s27
    %s34 = sor.u32 %s32, %s33
    %p35 = scmp.eq.s32.totalorder %s34, 0
    %s37 = sadd.s32 %s36, 1
    %s38 = scalar_select %p35, %s36, %s37
    %p41 = pneg %p35
    %p42 = scmp.eq.s32.totalorder %s12, 1
    %p43 = por %p41, %p42
    %p44 = scmp.ne.s32.totalorder %s36, %s39
    %p45 = scmp.eq.s32.totalorder %s12, 0
    %p46 = por %p44, %p45
    %p47 = scmp.ne.s32.totalorder %s36, %s39
    %p48 = scmp.eq.s32.totalorder %s17, 1
    %p49 = por %p47, %p48
    %p50 = scmp.ne.s32.totalorder %s39, %s40
    %p51 = scmp.eq.s32.totalorder %s17, 0
    %p52 = por %p50, %p51
    %p53 = scmp.ne.s32.totalorder %s39, %s40
    %p54 = scmp.eq.s32.totalorder %s18, 1
    %p55 = por %p53, %p54
    %p57 = scmp.ne.s32.totalorder %s40, %s56
    %p58 = scmp.eq.s32.totalorder %s18, 0
    %p59 = por %p57, %p58
    %s61 = sadd.s32 %s60, 1
    %p64 = scmp.eq.s32.totalorder %s12, 1
    %p65 = scmp.ne.s32.totalorder %s60, %s62
    %p66 = scmp.eq.s32.totalorder %s12, 0
    %p67 = por %p65, %p66
    %p68 = scmp.ne.s32.totalorder %s60, %s62
    %p69 = scmp.eq.s32.totalorder %s17, 1
    %p70 = por %p68, %p69
    %p71 = scmp.ne.s32.totalorder %s62, %s63
    %p72 = scmp.eq.s32.totalorder %s17, 0
    %p73 = por %p71, %p72
    %p74 = scmp.ne.s32.totalorder %s62, %s63
    %p75 = scmp.eq.s32.totalorder %s18, 1
    %p76 = por %p74, %p75
    %p78 = scmp.ne.s32.totalorder %s63, %s77
    %p79 = scmp.eq.s32.totalorder %s18, 0
    %p80 = por %p78, %p79
    %s82 = sadd.s32 %s81, 1
    %p85 = scmp.eq.s32.totalorder %s12, 1
    %p86 = scmp.ne.s32.totalorder %s81, %s83
    %p87 = scmp.eq.s32.totalorder %s12, 0
    %p88 = por %p86, %p87
    %p89 = scmp.ne.s32.totalorder %s81, %s83
    %p90 = scmp.eq.s32.totalorder %s17, 1
    %p91 = por %p89, %p90
    %p92 = scmp.ne.s32.totalorder %s83, %s84
    %p93 = scmp.eq.s32.totalorder %s17, 0
    %p94 = por %p92, %p93
    %p95 = scmp.ne.s32.totalorder %s83, %s84
    %p96 = scmp.eq.s32.totalorder %s18, 1
    %p97 = por %p95, %p96
    %p99 = scmp.ne.s32.totalorder %s84, %s98
    %p100 = scmp.eq.s32.totalorder %s18, 0
    %p101 = por %p99, %p100
    %s102 = ssub.s32 %s19, %s31
    %s103 = ssub.s32 %s20, %s27
    %s104 = sor.u32 %s102, %s103
    %p105 = scmp.eq.s32.totalorder %s104, 0
    %s107 = sadd.s32 %s106, 1
    %s108 = scalar_select %p105, %s106, %s107
    %p111 = pneg %p105
    %p112 = scmp.eq.s32.totalorder %s12, 1
    %p113 = por %p111, %p112
    %p114 = scmp.ne.s32.totalorder %s106, %s109
    %p115 = scmp.eq.s32.totalorder %s12, 0
    %p116 = por %p114, %p115
    %p117 = scmp.ne.s32.totalorder %s106, %s109
    %p118 = scmp.eq.s32.totalorder %s17, 1
    %p119 = por %p117, %p118
    %p120 = scmp.ne.s32.totalorder %s109, %s110
    %p121 = scmp.eq.s32.totalorder %s17, 0
    %p122 = por %p120, %p121
    %p123 = scmp.ne.s32.totalorder %s109, %s110
    %p124 = scmp.eq.s32.totalorder %s18, 1
    %p125 = por %p123, %p124
    %p127 = scmp.ne.s32.totalorder %s110, %s126
    %p128 = scmp.eq.s32.totalorder %s18, 0
    %p129 = por %p127, %p128
    %s130 = ssub.s32 %s19, %s31
    %s131 = ssub.s32 %s20, %s27
    %s132 = sor.u32 %s130, %s131
    %p133 = scmp.eq.s32.totalorder %s132, 0
    %s135 = sadd.s32 %s134, 1
    %s136 = scalar_select %p133, %s134, %s135
    %p139 = pneg %p133
    %p140 = scmp.eq.s32.totalorder %s12, 1
    %p141 = por %p139, %p140
    %p142 = scmp.ne.s32.totalorder %s134, %s137
    %p143 = scmp.eq.s32.totalorder %s12, 0
    %p144 = por %p142, %p143
    %p145 = scmp.ne.s32.totalorder %s134, %s137
    %p146 = scmp.eq.s32.totalorder %s17, 1
    %p147 = por %p145, %p146
    %p148 = scmp.ne.s32.totalorder %s137, %s138
    %p149 = scmp.eq.s32.totalorder %s17, 0
    %p150 = por %p148, %p149
    %p151 = scmp.ne.s32.totalorder %s137, %s138
    %p152 = scmp.eq.s32.totalorder %s18, 1
    %p153 = por %p151, %p152
    %p155 = scmp.ne.s32.totalorder %s138, %s154
    %p156 = scmp.eq.s32.totalorder %s18, 0
    %p157 = por %p155, %p156
    %s158 = ssub.s32 %s19, %s31
    %s159 = ssub.s32 %s20, %s27
    %s160 = sor.u32 %s158, %s159
    %p161 = scmp.eq.s32.totalorder %s160, 0
    %s163 = sadd.s32 %s162, 1
    %s164 = scalar_select %p161, %s162, %s163
    %p167 = pneg %p161
    %p168 = scmp.eq.s32.totalorder %s12, 1
    %p169 = por %p167, %p168
    %p170 = scmp.ne.s32.totalorder %s162, %s165
    %p171 = scmp.eq.s32.totalorder %s12, 0
    %p172 = por %p170, %p171
    %p173 = scmp.ne.s32.totalorder %s162, %s165
    %p174 = scmp.eq.s32.totalorder %s17, 1
    %p175 = por %p173, %p174
    %p176 = scmp.ne.s32.totalorder %s165, %s166
    %p177 = scmp.eq.s32.totalorder %s17, 0
    %p178 = por %p176, %p177
    %p179 = scmp.ne.s32.totalorder %s165, %s166
    %p180 = scmp.eq.s32.totalorder %s18, 1
    %p181 = por %p179, %p180
    %p183 = scmp.ne.s32.totalorder %s166, %s182
    %p184 = scmp.eq.s32.totalorder %s18, 0
    %p185 = por %p183, %p184
    %p186 = scmp.le.s32.totalorder 1, %s12
    %p187 = scmp.lt.s32.totalorder %s12, 3
    %p188 = pnand %p186, %p187
    %p189 = pneg %p188
    // Predicated region
    $region9: #{tdnn_block.2} parent=5 // pred_check
      _
    $region10: #{tdnn_block.2} parent=5 // pred_check_branch
      %191 = sbr.rel (%p188) target = $region12
    $region11: #{tdnn_block.2} parent=5 // pred_region
      %s192 = ssub.s32 %s12, 1
      // Predicated region
      $region13: #{tdnn_block.2} parent=11 // pred_check
        %p193 = pneg %p73
      $region14: #{tdnn_block.2} parent=11 // pred_check_branch
        %195 = sbr.rel (%p193) target = $region16
      $region15: #{tdnn_block.2} parent=11 // pred_region
        _
      $region16: #{tdnn_block.2} parent=11 // pred_fallthru
        _
      // Predicated region
      $region17: #{tdnn_block.2} parent=11 // pred_check
        %p196 = pneg %p94
      $region18: #{tdnn_block.2} parent=11 // pred_check_branch
        %198 = sbr.rel (%p196) target = $region20
      $region19: #{tdnn_block.2} parent=11 // pred_region
        _
      $region20: #{tdnn_block.2} parent=11 // pred_fallthru
        _
    $region12: #{tdnn_block.2} parent=5 // pred_fallthru
      _
    %p199 = scmp.lt.s32.totalorder %s12, 2
    // Predicated region
    $region21: #{tdnn_block.2} parent=5 // pred_check
      %p200 = pneg %p199
    $region22: #{tdnn_block.2} parent=5 // pred_check_branch
      %202 = sbr.rel (%p200) target = $region24
    $region23: #{tdnn_block.2} parent=5 // pred_region
      // Predicated region
      $region25: #{tdnn_block.2} parent=23 // pred_check
        %p203 = pneg %p46
      $region26: #{tdnn_block.2} parent=23 // pred_check_branch
        %205 = sbr.rel (%p203) target = $region28
      $region27: #{tdnn_block.2} parent=23 // pred_region
        %p206 = scmp.lt.s32.totalorder %s19, 1
        %s207 = scalar_select %p206, %s19, 1
        %p208 = scmp.lt.s32.totalorder %s20, 0
        %s209 = scalar_select %p208, %s20, 0
        %s210 = smul.addr %s209, 2
        %s211 = smul.addr %s207, 2
        %s212 = sadd.s32 %s210, %s211
        %s213 = smul.addr %s212, 8
        %s214 = scalar_lea.vmem %s0, %s213
      $region28: #{tdnn_block.2} parent=23 // pred_fallthru
        _
    $region24: #{tdnn_block.2} parent=5 // pred_fallthru
      _
    %p215 = scmp.le.s32.totalorder 1, %s12
    %p216 = scmp.lt.s32.totalorder %s12, 3
    %p217 = pnand %p215, %p216
    %p218 = pneg %p217
    // Predicated region
    $region29: #{tdnn_block.2} parent=5 // pred_check
      _
    $region30: #{tdnn_block.2} parent=5 // pred_check_branch
      %220 = sbr.rel (%p217) target = $region32
    $region31: #{tdnn_block.2} parent=5 // pred_region
      %s221 = ssub.s32 %s12, 1
      %p222 = scmp.lt.s32.totalorder %s21, 1
      %s223 = scalar_select %p222, %s21, 1
      %p224 = scmp.lt.s32.totalorder %s22, 0
      %s225 = scalar_select %p224, %s22, 0
      %s226 = smul.addr %s225, 2
      %s227 = smul.addr %s223, 2
      %s228 = sadd.s32 %s226, %s227
      %s229 = smul.addr %s228, 8
      %s230 = scalar_lea.vmem %s0, %s229
      %p231 = pneg %p52
      %p232 = pneg %p49
      %p233 = pneg %p73
      %p234 = pneg %p70
      %p235 = pneg %p94
      %p236 = pneg %p91
      %p237 = pneg %p122
      %p238 = pneg %p119
      %p239 = scmp.lt.s32.totalorder %s21, 1
      %s240 = scalar_select %p239, %s21, 1
      %p241 = scmp.lt.s32.totalorder %s22, 0
      %s242 = scalar_select %p241, %s22, 0
      %s243 = sadd.s32 %s242, %s240
      %s244 = smul.addr %s243, 8
      %s245 = scalar_lea.vmem %s3, %s244
      %p246 = pneg %p150
      %p247 = pneg %p147
      %p248 = scmp.lt.s32.totalorder %s21, 1
      %s249 = scalar_select %p248, %s21, 1
      %p250 = scmp.lt.s32.totalorder %s22, 0
      %s251 = scalar_select %p250, %s22, 0
      %s252 = sadd.s32 %s251, %s249
      %s253 = smul.addr %s252, 8
      %s254 = scalar_lea.vmem %s4, %s253
      %p255 = pneg %p178
      %p256 = pneg %p175
      %p257 = scmp.lt.s32.totalorder %s21, 1
      %s258 = scalar_select %p257, %s21, 1
      %p259 = scmp.lt.s32.totalorder %s22, 0
      %s260 = scalar_select %p259, %s22, 0
      %s261 = sadd.s32 %s260, %s258
      %s262 = smul.addr %s261, 8
      %s263 = scalar_lea.vmem %s5, %s262
      %p264 = scmp.lt.s32.totalorder %s21, 1
      %s265 = scalar_select %p264, %s21, 1
      %p266 = scmp.lt.s32.totalorder %s22, 0
      %s267 = scalar_select %p266, %s22, 0
      %s268 = smul.addr %s267, 2
      %s269 = smul.addr %s265, 2
      %s270 = sadd.s32 %s268, %s269
      %s271 = smul.addr %s270, 8
      %s272 = scalar_lea.vmem %s0, %s271
      %p273 = scmp.lt.s32.totalorder %s21, 1
      %s274 = scalar_select %p273, %s21, 1
      %p275 = scmp.lt.s32.totalorder %s22, 0
      %s276 = scalar_select %p275, %s22, 0
      %s277 = sadd.s32 %s276, %s274
      %s278 = smul.addr %s277, 8
      %s279 = scalar_lea.vmem %s3, %s278
      %p280 = scmp.lt.s32.totalorder %s21, 1
      %s281 = scalar_select %p280, %s21, 1
      %p282 = scmp.lt.s32.totalorder %s22, 0
      %s283 = scalar_select %p282, %s22, 0
      %s284 = sadd.s32 %s283, %s281
      %s285 = smul.addr %s284, 8
      %s286 = scalar_lea.vmem %s4, %s285
      %p287 = scmp.lt.s32.totalorder %s21, 1
      %s288 = scalar_select %p287, %s21, 1
      %p289 = scmp.lt.s32.totalorder %s22, 0
      %s290 = scalar_select %p289, %s22, 0
      %s291 = sadd.s32 %s290, %s288
      %s292 = smul.addr %s291, 8
      %s293 = scalar_lea.vmem %s5, %s292
      %v294 = vld [vmem:[%s272] sm:$0xff]
      %v295 = vld [vmem:[%s272 + $0x8] sm:$0xff]
      %v296 = vld [vmem:[%s1] sm:$0xff]
      %s297 = scalar_lea.vmem %s1, 8
      %v298 = vld [vmem:[%s297] sm:$0xff]
      %301 = vrot.lane.b32.xlu0 %v294, 127
      %v302 = vpop.permute.xlu0 %301
      %303 = vrot.lane.b32.xlu0 %v295, 127
      %v304 = vpop.permute.xlu0 %303
      %vm305 = vcmask 1039360
      %v306 = vsel %vm305, %v302, %v304
      %vm308 = vcmask 64512
      %v310 = vsel %vm308, %v298, 0
      %312 = vmatprep.subr.mxu0 0.0
      %313 = vmatpush1.msra.mxu0 0.0
      %314 = vmatprep.subr.mxu0 0.0
      %315 = vmatpush1.msra.mxu0 0.0
      %316 = vmatprep.subr.mxu0 0.0
      %317 = vmatpush1.msra.mxu0 0.0
      %318 = vmatprep.subr.mxu0 0.0
      %319 = vmatpush1.msra.mxu0 0.0
      %320 = vmatprep.subr.mxu0 0.0
      %321 = vmatpush1.msra.mxu0 0.0
      %322 = vmatprep.subr.mxu0 0.0
      %323 = vmatpush1.msra.mxu0 0.0
      %324 = vmatprep.subr.mxu0 0.0
      %325 = vmatpush1.msra.mxu0 0.0
      %326 = vmatprep.subr.mxu0 0.0
      %327 = vmatpush1.msra.mxu0 0.0
      %328 = vmatprep.subr.mxu0 0.0
      %329 = vmatpush1.msra.mxu0 0.0
      %330 = vmatprep.subr.mxu0 0.0
      %331 = vmatpush1.msra.mxu0 0.0
      %332 = vmatprep.subr.mxu0 0.0
      %333 = vmatpush1.msra.mxu0 0.0
      %334 = vmatprep.subr.mxu0 0.0
      %335 = vmatpush1.msra.mxu0 0.0
      %336 = vmatprep.subr.mxu0 0.0
      %337 = vmatpush1.msra.mxu0 0.0
      %338 = vmatprep.subr.mxu0 0.0
      %339 = vmatpush1.msra.mxu0 0.0
      %340 = vmatprep.subr.mxu0 0.0
      %341 = vmatpush1.msra.mxu0 0.0
      %342 = vmatprep.subr.mxu0 0.0
      %343 = vmatpush1.msra.mxu0 %v306
      %344 = vmatprep.subr.mxu0 0.0
      %345 = vmatpush2.msra.mxu0 0.0
      %346 = vmatprep.subr.mxu0 0.0
      %347 = vmatpush2.msra.mxu0 0.0
      %348 = vmatprep.subr.mxu0 0.0
      %349 = vmatpush2.msra.mxu0 0.0
      %350 = vmatprep.subr.mxu0 0.0
      %351 = vmatpush2.msra.mxu0 0.0
      %352 = vmatprep.subr.mxu0 0.0
      %353 = vmatpush2.msra.mxu0 0.0
      %354 = vmatprep.subr.mxu0 0.0
      %355 = vmatpush2.msra.mxu0 0.0
      %356 = vmatprep.subr.mxu0 0.0
      %357 = vmatpush2.msra.mxu0 0.0
      %358 = vmatprep.subr.mxu0 0.0
      %359 = vmatpush2.msra.mxu0 0.0
      %360 = vmatprep.subr.mxu0 0.0
      %361 = vmatpush2.msra.mxu0 0.0
      %362 = vmatprep.subr.mxu0 0.0
      %363 = vmatpush2.msra.mxu0 0.0
      %364 = vmatprep.subr.mxu0 0.0
      %365 = vmatpush2.msra.mxu0 0.0
      %366 = vmatprep.subr.mxu0 0.0
      %367 = vmatpush2.msra.mxu0 0.0
      %368 = vmatprep.subr.mxu0 0.0
      %369 = vmatpush2.msra.mxu0 0.0
      %370 = vmatprep.subr.mxu0 0.0
      %371 = vmatpush2.msra.mxu0 0.0
      %372 = vmatprep.subr.mxu0 0.0
      %373 = vmatpush2.msra.mxu0 0.0
      %374 = vmatprep.subr.mxu0 0.0
      %375 = vmatpush2.msra.mxu0 0.0
      %376 = vmatprep.mubr.f32.mxu0 0.0
      %377 = vmatmul.mubr.f32.gmra.mxu0 %v310
      %v378 = vpop.f32.mrf.mxu0
      %v379 = vadd.f32 0.0, %v378
      %v380 = vpop.f32.mrf.mxu0
      %381 = vdwg.mxu0
      %v383 = vsel %vm308, %v296, 0
      %385 = vmatprep.subr.mxu0 0.0
      %386 = vmatpush1.msra.mxu0 0.0
      %387 = vmatprep.subr.mxu0 0.0
      %388 = vmatpush1.msra.mxu0 0.0
      %389 = vmatprep.subr.mxu0 0.0
      %390 = vmatpush1.msra.mxu0 0.0
      %391 = vmatprep.subr.mxu0 0.0
      %392 = vmatpush1.msra.mxu0 0.0
      %393 = vmatprep.subr.mxu0 0.0
      %394 = vmatpush1.msra.mxu0 0.0
      %395 = vmatprep.subr.mxu0 0.0
      %396 = vmatpush1.msra.mxu0 0.0
      %397 = vmatprep.subr.mxu0 0.0
      %398 = vmatpush1.msra.mxu0 0.0
      %399 = vmatprep.subr.mxu0 0.0
      %400 = vmatpush1.msra.mxu0 0.0
      %401 = vmatprep.subr.mxu0 0.0
      %402 = vmatpush1.msra.mxu0 0.0
      %403 = vmatprep.subr.mxu0 0.0
      %404 = vmatpush1.msra.mxu0 0.0
      %405 = vmatprep.subr.mxu0 0.0
      %406 = vmatpush1.msra.mxu0 0.0
      %407 = vmatprep.subr.mxu0 0.0
      %408 = vmatpush1.msra.mxu0 0.0
      %409 = vmatprep.subr.mxu0 0.0
      %410 = vmatpush1.msra.mxu0 0.0
      %411 = vmatprep.subr.mxu0 0.0
      %412 = vmatpush1.msra.mxu0 0.0
      %413 = vmatprep.subr.mxu0 0.0
      %414 = vmatpush1.msra.mxu0 0.0
      %415 = vmatprep.subr.mxu0 0.0
      %416 = vmatpush1.msra.mxu0 %v294
      %417 = vmatprep.subr.mxu0 0.0
      %418 = vmatpush2.msra.mxu0 0.0
      %419 = vmatprep.subr.mxu0 0.0
      %420 = vmatpush2.msra.mxu0 0.0
      %421 = vmatprep.subr.mxu0 0.0
      %422 = vmatpush2.msra.mxu0 0.0
      %423 = vmatprep.subr.mxu0 0.0
      %424 = vmatpush2.msra.mxu0 0.0
      %425 = vmatprep.subr.mxu0 0.0
      %426 = vmatpush2.msra.mxu0 0.0
      %427 = vmatprep.subr.mxu0 0.0
      %428 = vmatpush2.msra.mxu0 0.0
      %429 = vmatprep.subr.mxu0 0.0
      %430 = vmatpush2.msra.mxu0 0.0
      %431 = vmatprep.subr.mxu0 0.0
      %432 = vmatpush2.msra.mxu0 0.0
      %433 = vmatprep.subr.mxu0 0.0
      %434 = vmatpush2.msra.mxu0 0.0
      %435 = vmatprep.subr.mxu0 0.0
      %436 = vmatpush2.msra.mxu0 0.0
      %437 = vmatprep.subr.mxu0 0.0
      %438 = vmatpush2.msra.mxu0 0.0
      %439 = vmatprep.subr.mxu0 0.0
      %440 = vmatpush2.msra.mxu0 0.0
      %441 = vmatprep.subr.mxu0 0.0
      %442 = vmatpush2.msra.mxu0 0.0
      %443 = vmatprep.subr.mxu0 0.0
      %444 = vmatpush2.msra.mxu0 0.0
      %445 = vmatprep.subr.mxu0 0.0
      %446 = vmatpush2.msra.mxu0 0.0
      %447 = vmatprep.subr.mxu0 0.0
      %448 = vmatpush2.msra.mxu0 0.0
      %449 = vmatprep.mubr.f32.mxu0 0.0
      %450 = vmatmul.mubr.f32.gmra.mxu0 %v383
      %v451 = vpop.f32.mrf.mxu0
      %v452 = vadd.f32 %v379, %v451
      %v453 = vpop.f32.mrf.mxu0
      %454 = vdwg.mxu0
      %s455 = scalar_lea.vmem %s1, 16
      %v456 = vld [vmem:[%s455] sm:$0xff]
      %457 = vrot.lane.b32.xlu0 %v294, 126
      %v458 = vpop.permute.xlu0 %457
      %459 = vrot.lane.b32.xlu0 %v295, 126
      %v460 = vpop.permute.xlu0 %459
      %vm461 = vcmask 1031168
      %v462 = vsel %vm461, %v458, %v460
      %v465 = vsel %vm308, %v456, 0
      %467 = vmatprep.subr.mxu0 0.0
      %468 = vmatpush1.msra.mxu0 0.0
      %469 = vmatprep.subr.mxu0 0.0
      %470 = vmatpush1.msra.mxu0 0.0
      %471 = vmatprep.subr.mxu0 0.0
      %472 = vmatpush1.msra.mxu0 0.0
      %473 = vmatprep.subr.mxu0 0.0
      %474 = vmatpush1.msra.mxu0 0.0
      %475 = vmatprep.subr.mxu0 0.0
      %476 = vmatpush1.msra.mxu0 0.0
      %477 = vmatprep.subr.mxu0 0.0
      %478 = vmatpush1.msra.mxu0 0.0
      %479 = vmatprep.subr.mxu0 0.0
      %480 = vmatpush1.msra.mxu0 0.0
      %481 = vmatprep.subr.mxu0 0.0
      %482 = vmatpush1.msra.mxu0 0.0
      %483 = vmatprep.subr.mxu0 0.0
      %484 = vmatpush1.msra.mxu0 0.0
      %485 = vmatprep.subr.mxu0 0.0
      %486 = vmatpush1.msra.mxu0 0.0
      %487 = vmatprep.subr.mxu0 0.0
      %488 = vmatpush1.msra.mxu0 0.0
      %489 = vmatprep.subr.mxu0 0.0
      %490 = vmatpush1.msra.mxu0 0.0
      %491 = vmatprep.subr.mxu0 0.0
      %492 = vmatpush1.msra.mxu0 0.0
      %493 = vmatprep.subr.mxu0 0.0
      %494 = vmatpush1.msra.mxu0 0.0
      %495 = vmatprep.subr.mxu0 0.0
      %496 = vmatpush1.msra.mxu0 0.0
      %497 = vmatprep.subr.mxu0 0.0
      %498 = vmatpush1.msra.mxu0 %v462
      %499 = vmatprep.subr.mxu0 0.0
      %500 = vmatpush2.msra.mxu0 0.0
      %501 = vmatprep.subr.mxu0 0.0
      %502 = vmatpush2.msra.mxu0 0.0
      %503 = vmatprep.subr.mxu0 0.0
      %504 = vmatpush2.msra.mxu0 0.0
      %505 = vmatprep.subr.mxu0 0.0
      %506 = vmatpush2.msra.mxu0 0.0
      %507 = vmatprep.subr.mxu0 0.0
      %508 = vmatpush2.msra.mxu0 0.0
      %509 = vmatprep.subr.mxu0 0.0
      %510 = vmatpush2.msra.mxu0 0.0
      %511 = vmatprep.subr.mxu0 0.0
      %512 = vmatpush2.msra.mxu0 0.0
      %513 = vmatprep.subr.mxu0 0.0
      %514 = vmatpush2.msra.mxu0 0.0
      %515 = vmatprep.subr.mxu0 0.0
      %516 = vmatpush2.msra.mxu0 0.0
      %517 = vmatprep.subr.mxu0 0.0
      %518 = vmatpush2.msra.mxu0 0.0
      %519 = vmatprep.subr.mxu0 0.0
      %520 = vmatpush2.msra.mxu0 0.0
      %521 = vmatprep.subr.mxu0 0.0
      %522 = vmatpush2.msra.mxu0 0.0
      %523 = vmatprep.subr.mxu0 0.0
      %524 = vmatpush2.msra.mxu0 0.0
      %525 = vmatprep.subr.mxu0 0.0
      %526 = vmatpush2.msra.mxu0 0.0
      %527 = vmatprep.subr.mxu0 0.0
      %528 = vmatpush2.msra.mxu0 0.0
      %529 = vmatprep.subr.mxu0 0.0
      %530 = vmatpush2.msra.mxu0 0.0
      %531 = vmatprep.mubr.f32.mxu0 0.0
      %532 = vmatmul.mubr.f32.gmra.mxu0 %v465
      %v533 = vpop.f32.mrf.mxu0
      %v534 = vadd.f32 0.0, %v533
      %v535 = vpop.f32.mrf.mxu0
      %536 = vdwg.mxu0
      %v537 = vadd.f32 %v452, %v534
      %v538 = vld [vmem:[%s2] sm:$0xff]
      %540 = vset.pattern.permute.xlu0 0
      %541 = vperm.xlu0 %540, %v538
      %v542 = vpop.permute.xlu0 %541
      %v544 = vadd.f32 %v537, %v542
      %v545 = vmax.f32 %v544, 0.0
      %546 = vst [vmem:[%s279] sm:$0xff] %v545
      %s547 = smul.u32 %s22, 128
      %s548 = ssub.s32 16, %s547
      %p549 = scmp.lt.s32.totalorder %s548, 128
      %s550 = scalar_select %p549, %s548, 128
      %v551 = vlaneseq
      %v552 = vand.u32 %v551, 127
      %v553 = vstv %s550
      %vm554 = vcmp.lt.s32.totalorder %v552, %v553
      %v555 = vsel %vm554, %v545, 0.0
      %556 = vadd.xlane.f32.xlu0 %v555
      %v557 = vpop.xlane.xlu0 %556
      %vm558 = vcmask 7168
      %559 = vst.msk [vmem:[%s286] sm:$0xff] %vm558, %v557
      %v560 = vmul.f32 %v555, %v555
      %561 = vadd.xlane.f32.xlu0 %v560
      %v562 = vpop.xlane.xlu0 %561
      %563 = vst.msk [vmem:[%s293] sm:$0xff] %vm558, %v562
      %p564 = scmp.lt.s32.totalorder %s21, 1
      %s565 = scalar_select %p564, %s21, 1
      %p566 = scmp.lt.s32.totalorder %s22, 0
      %s567 = scalar_select %p566, %s22, 0
      %s568 = sadd.s32 %s567, %s565
      %s569 = smul.addr %s568, 8
      %s570 = scalar_lea.vmem %s3, %s569
      %p571 = scmp.lt.s32.totalorder %s21, 1
      %s572 = scalar_select %p571, %s21, 1
      %p573 = scmp.lt.s32.totalorder %s22, 0
      %s574 = scalar_select %p573, %s22, 0
      %s575 = sadd.s32 %s574, %s572
      %s576 = smul.addr %s575, 8
      %s577 = scalar_lea.vmem %s4, %s576
      %p578 = scmp.lt.s32.totalorder %s21, 1
      %s579 = scalar_select %p578, %s21, 1
      %p580 = scmp.lt.s32.totalorder %s22, 0
      %s581 = scalar_select %p580, %s22, 0
      %s582 = sadd.s32 %s581, %s579
      %s583 = smul.addr %s582, 8
      %s584 = scalar_lea.vmem %s5, %s583
      // Predicated region
      $region33: #{tdnn_block.2} parent=31 // pred_check
        %p585 = pneg %p119
      $region34: #{tdnn_block.2} parent=31 // pred_check_branch
        %587 = sbr.rel (%p585) target = $region36
      $region35: #{tdnn_block.2} parent=31 // pred_region
        _
      $region36: #{tdnn_block.2} parent=31 // pred_fallthru
        _
      // Predicated region
      $region37: #{tdnn_block.2} parent=31 // pred_check
        %p588 = pneg %p147
      $region38: #{tdnn_block.2} parent=31 // pred_check_branch
        %590 = sbr.rel (%p588) target = $region40
      $region39: #{tdnn_block.2} parent=31 // pred_region
        _
      $region40: #{tdnn_block.2} parent=31 // pred_fallthru
        _
      // Predicated region
      $region41: #{tdnn_block.2} parent=31 // pred_check
        %p591 = pneg %p175
      $region42: #{tdnn_block.2} parent=31 // pred_check_branch
        %593 = sbr.rel (%p591) target = $region44
      $region43: #{tdnn_block.2} parent=31 // pred_region
        _
      $region44: #{tdnn_block.2} parent=31 // pred_fallthru
        _
    $region32: #{tdnn_block.2} parent=5 // pred_fallthru
      _
    %p594 = scmp.le.s32.totalorder 2, %s12
    // Predicated region
    $region45: #{tdnn_block.2} parent=5 // pred_check
      %p595 = pneg %p594
    $region46: #{tdnn_block.2} parent=5 // pred_check_branch
      %597 = sbr.rel (%p595) target = $region48
    $region47: #{tdnn_block.2} parent=5 // pred_region
      %s598 = ssub.s32 %s12, 2
      // Predicated region
      $region49: #{tdnn_block.2} parent=47 // pred_check
        %p599 = pneg %p125
      $region50: #{tdnn_block.2} parent=47 // pred_check_branch
        %601 = sbr.rel (%p599) target = $region52
      $region51: #{tdnn_block.2} parent=47 // pred_region
        %p602 = scmp.lt.s32.totalorder %s23, 1
        %s603 = scalar_select %p602, %s23, 1
        %p604 = scmp.lt.s32.totalorder %s24, 0
        %s605 = scalar_select %p604, %s24, 0
        %s606 = sadd.s32 %s605, %s603
        %s607 = smul.addr %s606, 8
        %s608 = scalar_lea.vmem %s3, %s607
      $region52: #{tdnn_block.2} parent=47 // pred_fallthru
        _
      // Predicated region
      $region53: #{tdnn_block.2} parent=47 // pred_check
        %p609 = pneg %p153
      $region54: #{tdnn_block.2} parent=47 // pred_check_branch
        %611 = sbr.rel (%p609) target = $region56
      $region55: #{tdnn_block.2} parent=47 // pred_region
        %p612 = scmp.lt.s32.totalorder %s23, 1
        %s613 = scalar_select %p612, %s23, 1
        %p614 = scmp.lt.s32.totalorder %s24, 0
        %s615 = scalar_select %p614, %s24, 0
        %s616 = sadd.s32 %s615, %s613
        %s617 = smul.addr %s616, 8
        %s618 = scalar_lea.vmem %s4, %s617
      $region56: #{tdnn_block.2} parent=47 // pred_fallthru
        _
      // Predicated region
      $region57: #{tdnn_block.2} parent=47 // pred_check
        %p619 = pneg %p181
      $region58: #{tdnn_block.2} parent=47 // pred_check_branch
        %621 = sbr.rel (%p619) target = $region60
      $region59: #{tdnn_block.2} parent=47 // pred_region
        %p622 = scmp.lt.s32.totalorder %s23, 1
        %s623 = scalar_select %p622, %s23, 1
        %p624 = scmp.lt.s32.totalorder %s24, 0
        %s625 = scalar_select %p624, %s24, 0
        %s626 = sadd.s32 %s625, %s623
        %s627 = smul.addr %s626, 8
        %s628 = scalar_lea.vmem %s5, %s627
      $region60: #{tdnn_block.2} parent=47 // pred_fallthru
        _
    $region48: #{tdnn_block.2} parent=5 // pred_fallthru
      _
  $region6: #{tdnn_block.2} parent=0 // loop_footer
    %s16 = sadd.s32 1, %s12
  $region7: #{tdnn_block.2} parent=0 // loop_footer_branch
    %11 = sbr.rel target = $region3
  $region8: #{tdnn_block.2} parent=0 // loop_exit
    _

// kernel: tdnn_block.3
$region0: #{tdnn_block.3}
  #allocation0 [shape = 'u32[]', space=smem, size = 0x4, offset = 0x4, fixed_abs, tag = 'smem constant byte address 0x4 - core index']
  #allocation1 [shape = 'u32[144,128]{1,0:T(1,128)}', space=vmem, size = 0x12000, scoped, tag = 'internal scratch']
  %s0 = inlined_call_operand.vmem [shape: f32[2,8,128], index: 0, kind: input, shape index: {}, may-alias: {0,3}]
  %s1 = inlined_call_operand.vmem [shape: f32[8,1], index: 1, kind: input, shape index: {}]
  %s2 = inlined_call_operand.vmem [shape: f32[8,1], index: 2, kind: input, shape index: {}]
  %s3 = inlined_call_operand.vmem [shape: f32[2,8,128], index: 3, kind: output, shape index: {}, may-alias: {0,3}]
  %s4 = sld [smem:[#allocation0]]
  $region45: #{tdnn_block.3} parent=0
    _
  %s6 = ssub.s32 1, %s4
  %s7 = scalar_select 0, %s6, %s4
  loop: start=0, step=1, limit=4
  $region2: #{tdnn_block.3} parent=0 // loop_pre_header
    _
  $region3: #{tdnn_block.3} parent=0 // loop_header
    %s9 = sphi 0, %s13
    %p10 = scmp.ge.s32.totalorder %s9, 4
    %s16 = sphi 0, %s28
    %s17 = sphi 0, %s24
    %s18 = sphi 0, %s16
    %s19 = sphi 0, %s17
    %s20 = sphi 0, %s18
    %s21 = sphi 0, %s19
    %s33 = sphi 0, %s35
    %s36 = sphi 0, %s33
    %s37 = sphi 0, %s36
    %s53 = sphi 0, %s37
    %s57 = sphi 0, %s57
    %s59 = sphi 0, %s57
    %s60 = sphi 0, %s59
    %s74 = sphi 0, %s60
    %s78 = sphi 0, %s78
    %s80 = sphi 0, %s78
    %s81 = sphi 0, %s80
    %s95 = sphi 0, %s81
    %s103 = sphi 0, %s105
    %s106 = sphi 0, %s103
    %s107 = sphi 0, %s106
    %s123 = sphi 0, %s107
  $region4: #{tdnn_block.3} parent=0 // loop_header_branch
    %12 = sbr.rel (%p10) target = $region8
  $region5: #{tdnn_block.3} parent=0 // loop_body
    %s14 = ssub.s32 %s9, 1
    %s15 = ssub.s32 %s9, 2
    %s22 = sadd.s32 1, %s17
    %p23 = scmp.ge.s32.totalorder %s22, 1
    %s24 = scalar_select %p23, 0, %s22
    %s25 = sadd.s32 1, %s16
    %s26 = scalar_select %p23, %s25, %s16
    %p27 = scmp.ge.s32.totalorder %s26, 2
    %s28 = scalar_select %p27, 0, %s26
    %s29 = ssub.s32 %s16, %s28
    %s30 = ssub.s32 %s17, %s24
    %s31 = sor.u32 %s29, %s30
    %p32 = scmp.eq.s32.totalorder %s31, 0
    %s34 = sadd.s32 %s33, 1
    %s35 = scalar_select %p32, %s33, %s34
    %p38 = pneg %p32
    %p39 = scmp.eq.s32.totalorder %s9, 1
    %p40 = por %p38, %p39
    %p41 = scmp.ne.s32.totalorder %s33, %s36
    %p42 = scmp.eq.s32.totalorder %s9, 0
    %p43 = por %p41, %p42
    %p44 = scmp.ne.s32.totalorder %s33, %s36
    %p45 = scmp.eq.s32.totalorder %s14, 1
    %p46 = por %p44, %p45
    %p47 = scmp.ne.s32.totalorder %s36, %s37
    %p48 = scmp.eq.s32.totalorder %s14, 0
    %p49 = por %p47, %p48
    %p50 = scmp.ne.s32.totalorder %s36, %s37
    %p51 = scmp.eq.s32.totalorder %s15, 1
    %p52 = por %p50, %p51
    %p54 = scmp.ne.s32.totalorder %s37, %s53
    %p55 = scmp.eq.s32.totalorder %s15, 0
    %p56 = por %p54, %p55
    %s58 = sadd.s32 %s57, 1
    %p61 = scmp.eq.s32.totalorder %s9, 1
    %p62 = scmp.ne.s32.totalorder %s57, %s59
    %p63 = scmp.eq.s32.totalorder %s9, 0
    %p64 = por %p62, %p63
    %p65 = scmp.ne.s32.totalorder %s57, %s59
    %p66 = scmp.eq.s32.totalorder %s14, 1
    %p67 = por %p65, %p66
    %p68 = scmp.ne.s32.totalorder %s59, %s60
    %p69 = scmp.eq.s32.totalorder %s14, 0
    %p70 = por %p68, %p69
    %p71 = scmp.ne.s32.totalorder %s59, %s60
    %p72 = scmp.eq.s32.totalorder %s15, 1
    %p73 = por %p71, %p72
    %p75 = scmp.ne.s32.totalorder %s60, %s74
    %p76 = scmp.eq.s32.totalorder %s15, 0
    %p77 = por %p75, %p76
    %s79 = sadd.s32 %s78, 1
    %p82 = scmp.eq.s32.totalorder %s9, 1
    %p83 = scmp.ne.s32.totalorder %s78, %s80
    %p84 = scmp.eq.s32.totalorder %s9, 0
    %p85 = por %p83, %p84
    %p86 = scmp.ne.s32.totalorder %s78, %s80
    %p87 = scmp.eq.s32.totalorder %s14, 1
    %p88 = por %p86, %p87
    %p89 = scmp.ne.s32.totalorder %s80, %s81
    %p90 = scmp.eq.s32.totalorder %s14, 0
    %p91 = por %p89, %p90
    %p92 = scmp.ne.s32.totalorder %s80, %s81
    %p93 = scmp.eq.s32.totalorder %s15, 1
    %p94 = por %p92, %p93
    %p96 = scmp.ne.s32.totalorder %s81, %s95
    %p97 = scmp.eq.s32.totalorder %s15, 0
    %p98 = por %p96, %p97
    %s99 = ssub.s32 %s16, %s28
    %s100 = ssub.s32 %s17, %s24
    %s101 = sor.u32 %s99, %s100
    %p102 = scmp.eq.s32.totalorder %s101, 0
    %s104 = sadd.s32 %s103, 1
    %s105 = scalar_select %p102, %s103, %s104
    %p108 = pneg %p102
    %p109 = scmp.eq.s32.totalorder %s9, 1
    %p110 = por %p108, %p109
    %p111 = scmp.ne.s32.totalorder %s103, %s106
    %p112 = scmp.eq.s32.totalorder %s9, 0
    %p113 = por %p111, %p112
    %p114 = scmp.ne.s32.totalorder %s103, %s106
    %p115 = scmp.eq.s32.totalorder %s14, 1
    %p116 = por %p114, %p115
    %p117 = scmp.ne.s32.totalorder %s106, %s107
    %p118 = scmp.eq.s32.totalorder %s14, 0
    %p119 = por %p117, %p118
    %p120 = scmp.ne.s32.totalorder %s106, %s107
    %p121 = scmp.eq.s32.totalorder %s15, 1
    %p122 = por %p120, %p121
    %p124 = scmp.ne.s32.totalorder %s107, %s123
    %p125 = scmp.eq.s32.totalorder %s15, 0
    %p126 = por %p124, %p125
    %p127 = scmp.le.s32.totalorder 1, %s9
    %p128 = scmp.lt.s32.totalorder %s9, 3
    %p129 = pnand %p127, %p128
    %p130 = pneg %p129
    // Predicated region
    $region9: #{tdnn_block.3} parent=5 // pred_check
      _
    $region10: #{tdnn_block.3} parent=5 // pred_check_branch
      %132 = sbr.rel (%p129) target = $region12
    $region11: #{tdnn_block.3} parent=5 // pred_region
      %s133 = ssub.s32 %s9, 1
      // Predicated region
      $region13: #{tdnn_block.3} parent=11 // pred_check
        %p134 = pneg %p70
      $region14: #{tdnn_block.3} parent=11 // pred_check_branch
        %136 = sbr.rel (%p134) target = $region16
      $region15: #{tdnn_block.3} parent=11 // pred_region
        _
      $region16: #{tdnn_block.3} parent=11 // pred_fallthru
        _
      // Predicated region
      $region17: #{tdnn_block.3} parent=11 // pred_check
        %p137 = pneg %p91
      $region18: #{tdnn_block.3} parent=11 // pred_check_branch
        %139 = sbr.rel (%p137) target = $region20
      $region19: #{tdnn_block.3} parent=11 // pred_region
        _
      $region20: #{tdnn_block.3} parent=11 // pred_fallthru
        _
    $region12: #{tdnn_block.3} parent=5 // pred_fallthru
      _
    %p140 = scmp.lt.s32.totalorder %s9, 2
    // Predicated region
    $region21: #{tdnn_block.3} parent=5 // pred_check
      %p141 = pneg %p140
    $region22: #{tdnn_block.3} parent=5 // pred_check_branch
      %143 = sbr.rel (%p141) target = $region24
    $region23: #{tdnn_block.3} parent=5 // pred_region
      // Predicated region
      $region25: #{tdnn_block.3} parent=23 // pred_check
        %p144 = pneg %p43
      $region26: #{tdnn_block.3} parent=23 // pred_check_branch
        %146 = sbr.rel (%p144) target = $region28
      $region27: #{tdnn_block.3} parent=23 // pred_region
        %p147 = scmp.lt.s32.totalorder %s16, 1
        %s148 = scalar_select %p147, %s16, 1
        %p149 = scmp.lt.s32.totalorder %s17, 0
        %s150 = scalar_select %p149, %s17, 0
        %s151 = sadd.s32 %s150, %s148
        %s152 = smul.addr %s151, 8
        %s153 = scalar_lea.vmem %s0, %s152
      $region28: #{tdnn_block.3} parent=23 // pred_fallthru
        _
    $region24: #{tdnn_block.3} parent=5 // pred_fallthru
      _
    %p154 = scmp.le.s32.totalorder 1, %s9
    %p155 = scmp.lt.s32.totalorder %s9, 3
    %p156 = pnand %p154, %p155
    %p157 = pneg %p156
    // Predicated region
    $region29: #{tdnn_block.3} parent=5 // pred_check
      _
    $region30: #{tdnn_block.3} parent=5 // pred_check_branch
      %159 = sbr.rel (%p156) target = $region32
    $region31: #{tdnn_block.3} parent=5 // pred_region
      %s160 = ssub.s32 %s9, 1
      %p161 = scmp.lt.s32.totalorder %s18, 1
      %s162 = scalar_select %p161, %s18, 1
      %p163 = scmp.lt.s32.totalorder %s19, 0
      %s164 = scalar_select %p163, %s19, 0
      %s165 = sadd.s32 %s164, %s162
      %s166 = smul.addr %s165, 8
      %s167 = scalar_lea.vmem %s0, %s166
      %p168 = pneg %p49
      %p169 = pneg %p46
      %p170 = pneg %p70
      %p171 = pneg %p67
      %p172 = pneg %p91
      %p173 = pneg %p88
      %p174 = pneg %p119
      %p175 = pneg %p116
      %p176 = scmp.lt.s32.totalorder %s18, 1
      %s177 = scalar_select %p176, %s18, 1
      %p178 = scmp.lt.s32.totalorder %s19, 0
      %s179 = scalar_select %p178, %s19, 0
      %s180 = sadd.s32 %s179, %s177
      %s181 = smul.addr %s180, 8
      %s182 = scalar_lea.vmem %s3, %s181
      %p183 = scmp.lt.s32.totalorder %s18, 1
      %s184 = scalar_select %p183, %s18, 1
      %p185 = scmp.lt.s32.totalorder %s19, 0
      %s186 = scalar_select %p185, %s19, 0
      %s187 = sadd.s32 %s186, %s184
      %s188 = smul.addr %s187, 8
      %s189 = scalar_lea.vmem %s0, %s188
      %p190 = scmp.lt.s32.totalorder %s18, 1
      %s191 = scalar_select %p190, %s18, 1
      %p192 = scmp.lt.s32.totalorder %s19, 0
      %s193 = scalar_select %p192, %s19, 0
      %s194 = sadd.s32 %s193, %s191
      %s195 = smul.addr %s194, 8
      %s196 = scalar_lea.vmem %s3, %s195
      %v197 = vld [vmem:[%s189] sm:$0xff]
      %v198 = vld [vmem:[%s1] sm:$0xff]
      %200 = vset.pattern.permute.xlu0 0
      %201 = vperm.xlu0 %200, %v198
      %v202 = vpop.permute.xlu0 %201
      %v204 = vmul.f32 %v197, %v202
      %v205 = vld [vmem:[%s2] sm:$0xff]
      %207 = vset.pattern.permute.xlu0 0
      %208 = vperm.xlu0 %207, %v205
      %v209 = vpop.permute.xlu0 %208
      %v211 = vadd.f32 %v204, %v209
      %212 = vst [vmem:[%s196] sm:$0xff] %v211
      %p213 = scmp.lt.s32.totalorder %s18, 1
      %s214 = scalar_select %p213, %s18, 1
      %p215 = scmp.lt.s32.totalorder %s19, 0
      %s216 = scalar_select %p215, %s19, 0
      %s217 = sadd.s32 %s216, %s214
      %s218 = smul.addr %s217, 8
      %s219 = scalar_lea.vmem %s3, %s218
      // Predicated region
      $region33: #{tdnn_block.3} parent=31 // pred_check
        %p220 = pneg %p116
      $region34: #{tdnn_block.3} parent=31 // pred_check_branch
        %222 = sbr.rel (%p220) target = $region36
      $region35: #{tdnn_block.3} parent=31 // pred_region
        _
      $region36: #{tdnn_block.3} parent=31 // pred_fallthru
        _
    $region32: #{tdnn_block.3} parent=5 // pred_fallthru
      _
    %p223 = scmp.le.s32.totalorder 2, %s9
    // Predicated region
    $region37: #{tdnn_block.3} parent=5 // pred_check
      %p224 = pneg %p223
    $region38: #{tdnn_block.3} parent=5 // pred_check_branch
      %226 = sbr.rel (%p224) target = $region40
    $region39: #{tdnn_block.3} parent=5 // pred_region
      %s227 = ssub.s32 %s9, 2
      // Predicated region
      $region41: #{tdnn_block.3} parent=39 // pred_check
        %p228 = pneg %p122
      $region42: #{tdnn_block.3} parent=39 // pred_check_branch
        %230 = sbr.rel (%p228) target = $region44
      $region43: #{tdnn_block.3} parent=39 // pred_region
        %p231 = scmp.lt.s32.totalorder %s20, 1
        %s232 = scalar_select %p231, %s20, 1
        %p233 = scmp.lt.s32.totalorder %s21, 0
        %s234 = scalar_select %p233, %s21, 0
        %s235 = sadd.s32 %s234, %s232
        %s236 = smul.addr %s235, 8
        %s237 = scalar_lea.vmem %s3, %s236
      $region44: #{tdnn_block.3} parent=39 // pred_fallthru
        _
    $region40: #{tdnn_block.3} parent=5 // pred_fallthru
      _
  $region6: #{tdnn_block.3} parent=0 // loop_footer
    %s13 = sadd.s32 1, %s9
  $region7: #{tdnn_block.3} parent=0 // loop_footer_branch
    %8 = sbr.rel target = $region3
  $region8: #{tdnn_block.3} parent=0 // loop_exit
    _

</llo_original>
